<compile_context>
chip_gen: v7x
topology: tpu7x:2x2x1
jax: 0.10.0
libtpu: 0.0.40
codegen_flags: <defaults>
</compile_context>

<pallas_src>
import functools

import jax
import jax.numpy as jnp
from jax.experimental import pallas as pl
from jax.experimental.pallas import tpu as pltpu


_BLOCK_BUDGET_BYTES = 2 * 1024 * 1024   # target bytes for one x block (all chips)
_MAX_BATCH_BLOCK = 8                    # cap on batch elements per grid step


def _round_up(x, m):
    return (x + m - 1) // m * m


def _vmem_limit(needed_bytes):
    # Explicit scoped-VMEM request: at least the v5e default (16 MiB), at most
    # the v7x default (32 MiB), so the same number is safe on every generation.
    return int(min(max(needed_bytes, 16 << 20), 32 << 20))


def _pick_batch_block(n, slab_bytes, budget):
    """Largest divisor of n (<= _MAX_BATCH_BLOCK) whose block fits the budget,
    preferring to keep >= 2 grid steps so both v7x TensorCores get work."""
    divisors = [d for d in range(1, min(n, _MAX_BATCH_BLOCK) + 1) if n % d == 0]
    fitting = [d for d in divisors if d * slab_bytes <= budget] or [1]
    nb = max(fitting)
    if n // nb < 2:
        smaller = [d for d in fitting if n // d >= 2]
        if smaller:
            nb = max(smaller)
    return nb


def _pick_spatial_tile(c, pp, dsize, budget=_BLOCK_BUDGET_BYTES):
    """Largest multiple-of-128 divisor of pp whose (C, TP) block fits budget."""
    best = 128
    t = 128
    while t <= pp:
        if pp % t == 0 and c * t * dsize <= budget:
            best = t
        t += 128
    return best


# ----------------------------------------------------------------------------
# Fused path: whole (Nb, C, Pp) slab per grid step, channel branch in-kernel.
# ----------------------------------------------------------------------------
def _csa_fused_kernel(x_ref, w_ref, b_ref, out_ref, *, nb, inv_p, precision):
    # x_ref/out_ref: (Nb, C, Pp)
    # w_ref: (2, C, C)  -> [0] = spatial 1x1 weight, [1] = channel 1x1 weight
    # b_ref: (C, 2) f32 -> [:, 0] = spatial bias,    [:, 1] = channel bias
    ws = w_ref[0]                                  # (C, C), native dtype (MXU)
    wc = w_ref[1].astype(jnp.float32)              # (C, C), f32 (tiny matvec)
    bs = b_ref[:, 0:1]                             # (C, 1) f32
    bc = b_ref[:, 1:2]                             # (C, 1) f32

    for b in range(nb):                            # static unroll, nb <= 8
        xb = x_ref[b]                              # (C, Pp), native dtype
        xbf = xb.astype(jnp.float32)

        # Channel attention: global avg-pool (padded zeros add 0 to the sum,
        # divide by the REAL P) -> 1x1 conv -> ReLU -> sigmoid.
        pooled = jnp.sum(xbf, axis=1, keepdims=True) * inv_p            # (C, 1)
        ch_lin = jnp.dot(wc, pooled, preferred_element_type=jnp.float32,
                         precision=precision) + bc                      # (C, 1)
        chat = jax.nn.sigmoid(jnp.maximum(ch_lin, 0.0))                  # (C, 1)

        # Spatial attention: 1x1 conv over channels, lane-dense on P -> sigmoid.
        sp_lin = jnp.dot(ws, xb, preferred_element_type=jnp.float32,
                         precision=precision) + bs                      # (C, Pp)
        spat = jax.nn.sigmoid(sp_lin)

        # Factored epilogue: x*chat + x*spat == x*(chat + spat).
        out_ref[b] = (xbf * (chat + spat)).astype(out_ref.dtype)


def _csa_fused_call(x, wc, bc, ws, bs, *, p_real):
    n, c, pp = x.shape
    dt = x.dtype
    dsize = jnp.dtype(dt).itemsize
    slab = c * pp * dsize

    nb = _pick_batch_block(n, slab, _BLOCK_BUDGET_BYTES)
    grid = (n // nb,)

    w_pack = jnp.stack([ws, wc], axis=0).astype(dt)                      # (2, C, C)
    b_pack = jnp.stack([bs, bc], axis=1).astype(jnp.float32)             # (C, 2)

    precision = jax.lax.Precision.HIGHEST if dt == jnp.float32 else None

    needed = (4 * nb * slab                 # double-buffered x + out blocks
              + 2 * 2 * c * c * dsize       # double-buffered packed weights
              + 2 * c * 2 * 4               # double-buffered packed biases
              + 3 * c * pp * 4              # f32 temporaries (per-batch slabs)
              + (2 << 20))                  # headroom

    kernel = functools.partial(_csa_fused_kernel, nb=nb, inv_p=1.0 / p_real,
                               precision=precision)

    return pl.pallas_call(
        kernel,
        out_shape=jax.ShapeDtypeStruct((n, c, pp), dt),
        grid_spec=pltpu.PrefetchScalarGridSpec(
            num_scalar_prefetch=0,
            grid=grid,
            in_specs=[
                pl.BlockSpec((nb, c, pp), lambda i: (i, 0, 0)),   # x batch block
                pl.BlockSpec((2, c, c), lambda i: (0, 0, 0)),     # packed weights
                pl.BlockSpec((c, 2), lambda i: (0, 0)),           # packed biases
            ],
            out_specs=pl.BlockSpec((nb, c, pp), lambda i: (i, 0, 0)),
        ),
        compiler_params=pltpu.CompilerParams(
            dimension_semantics=("parallel",),
            vmem_limit_bytes=_vmem_limit(needed),
        ),
    )(x, w_pack, b_pack)


# ----------------------------------------------------------------------------
# Tiled fallback: big C*P slabs; channel branch hoisted, P tiled lane-dense.
# ----------------------------------------------------------------------------
def _csa_tiled_kernel(x_ref, w_ref, side_ref, out_ref, *, precision):
    # x_ref/out_ref: (C, TP); w_ref: (C, C); side_ref: (C, 2) = [bs, chat_n] f32
    x = x_ref[...]
    bs = side_ref[:, 0:1]                            # (C, 1)
    chat = side_ref[:, 1:2]                          # (C, 1)

    sp_lin = jnp.dot(w_ref[...], x, preferred_element_type=jnp.float32,
                     precision=precision) + bs       # (C, TP)
    spat = jax.nn.sigmoid(sp_lin)

    xf = x.astype(jnp.float32)
    out_ref[...] = (xf * (chat + spat)).astype(out_ref.dtype)


def _csa_tiled_call(x, wc, bc, ws, bs, *, p_real):
    n, c, pp = x.shape
    dt = x.dtype
    dsize = jnp.dtype(dt).itemsize
    precision = jax.lax.Precision.HIGHEST if dt == jnp.float32 else None

    # Channel branch hoisted (output is only O(N*C)); the mean divides by the
    # real P, so the zero padding does not bias it.
    pooled = jnp.sum(x.astype(jnp.float32), axis=2) * (1.0 / p_real)      # (N, C)
    ch_lin = jnp.dot(pooled, wc.astype(jnp.float32).T,
                     precision=jax.lax.Precision.HIGHEST) + bc.astype(jnp.float32)
    chat = jax.nn.sigmoid(jnp.maximum(ch_lin, 0.0))                       # (N, C)

    # Pack the two tiny per-step side values into one stream: [bias, gate].
    side = jnp.stack(
        [jnp.broadcast_to(bs.astype(jnp.float32), (n, c)), chat], axis=2)  # (N, C, 2)

    ws_k = ws.astype(dt)
    tp = _pick_spatial_tile(c, pp, dsize)
    grid = (n, pp // tp)

    needed = (4 * c * tp * dsize            # double-buffered x + out blocks
              + 2 * c * c * dsize           # double-buffered weight
              + 2 * c * 2 * 4               # double-buffered side input
              + 3 * c * tp * 4              # f32 temporaries
              + (2 << 20))                  # headroom

    kernel = functools.partial(_csa_tiled_kernel, precision=precision)

    return pl.pallas_call(
        kernel,
        out_shape=jax.ShapeDtypeStruct((n, c, pp), dt),
        grid_spec=pltpu.PrefetchScalarGridSpec(
            num_scalar_prefetch=0,
            grid=grid,
            in_specs=[
                pl.BlockSpec((None, c, tp), lambda i, j: (i, 0, j)),   # x tile
                pl.BlockSpec((c, c), lambda i, j: (0, 0)),             # ws
                pl.BlockSpec((None, c, 2), lambda i, j: (i, 0, 0)),    # [bs, chat]
            ],
            out_specs=pl.BlockSpec((None, c, tp), lambda i, j: (i, 0, j)),
        ),
        compiler_params=pltpu.CompilerParams(
            dimension_semantics=("parallel", "parallel"),
            vmem_limit_bytes=_vmem_limit(needed),
        ),
    )(x, ws_k, side)


# ----------------------------------------------------------------------------
# Public wrapper
# ----------------------------------------------------------------------------
def csa_module_v2(x_nchw, wc, bc, ws, bs, *, force_tiled=False):
    """x_nchw: (N, C, H, W); wc/ws: (C, C) 1x1-conv weights; bc/bs: (C,) biases."""
    n, c, h, w = x_nchw.shape
    p = h * w
    dsize = jnp.dtype(x_nchw.dtype).itemsize

    # Free reshape (no transposes): (N, C, H, W) -> (N, C, P); pad P to a
    # multiple of 128 so stores stay lane-dense and tiles divide evenly.
    x = x_nchw.reshape(n, c, p)
    pp = _round_up(p, 128)
    if pp != p:
        x = jnp.pad(x, ((0, 0), (0, 0), (0, pp - p)))

    if (not force_tiled) and c * pp * dsize <= _BLOCK_BUDGET_BYTES:
        out = _csa_fused_call(x, wc, bc, ws, bs, p_real=p)
    else:
        out = _csa_tiled_call(x, wc, bc, ws, bs, p_real=p)

    if pp != p:
        out = out[:, :, :p]
    return out.reshape(n, c, h, w)


def csa_module_v2_ref(x_nchw, wc, bc, ws, bs):
    """Pure-JAX reference mirroring the PyTorch forward (f32, exact matmuls)."""
    hp = jax.lax.Precision.HIGHEST
    x = x_nchw.astype(jnp.float32)
    pooled = jnp.mean(x, axis=(2, 3))                                     # (N, C)
    ch_lin = jnp.dot(pooled, wc.astype(jnp.float32).T, precision=hp) + bc
    chat = jax.nn.sigmoid(jnp.maximum(ch_lin, 0.0))[:, :, None, None]
    sp_lin = (jnp.einsum("nchw,oc->nohw", x, ws.astype(jnp.float32), precision=hp)
              + bs[None, :, None, None])
    spat = jax.nn.sigmoid(sp_lin)
    return x * chat + x * spat


if __name__ == "__main__":
    # --- Test 1: small shapes, fused path (channel attention inside kernel) ---
    n, c, h, w = 2, 4, 16, 16
    kx, kwc, kbc, kws, kbs = jax.random.split(jax.random.PRNGKey(0), 5)
    x = jax.random.normal(kx, (n, c, h, w), dtype=jnp.float32)
    # PyTorch Conv2d(C, C, 1) weight is (C, C, 1, 1); we use the squeezed (C, C).
    wc = jax.random.normal(kwc, (c, c), dtype=jnp.float32) * 0.5
    bc = jax.random.normal(kbc, (c,), dtype=jnp.float32) * 0.1
    ws = jax.random.normal(kws, (c, c), dtype=jnp.float32) * 0.5
    bs = jax.random.normal(kbs, (c,), dtype=jnp.float32) * 0.1

    out = csa_module_v2(x, wc, bc, ws, bs)
    jax.block_until_ready(out)
    ref = csa_module_v2_ref(x, wc, bc, ws, bs)
    assert out.shape == (n, c, h, w)
    assert jnp.allclose(out, ref, atol=2e-5, rtol=2e-5), "fused path mismatch vs reference"

    # --- Test 2: non-128-multiple P, tiled fallback path (padding + TP tiling) ---
    n2, c2, h2, w2 = 2, 8, 20, 20
    kx2, kwc2, kbc2, kws2, kbs2 = jax.random.split(jax.random.PRNGKey(0), 5)
    x2 = jax.random.normal(kx2, (n2, c2, h2, w2), dtype=jnp.float32)
    wc2 = jax.random.normal(kwc2, (c2, c2), dtype=jnp.float32) * 0.3
    bc2 = jax.random.normal(kbc2, (c2,), dtype=jnp.float32) * 0.1
    ws2 = jax.random.normal(kws2, (c2, c2), dtype=jnp.float32) * 0.3
    bs2 = jax.random.normal(kbs2, (c2,), dtype=jnp.float32) * 0.1

    out2 = csa_module_v2(x2, wc2, bc2, ws2, bs2, force_tiled=True)
    jax.block_until_ready(out2)
    ref2 = csa_module_v2_ref(x2, wc2, bc2, ws2, bs2)
    assert out2.shape == (n2, c2, h2, w2)
    assert jnp.allclose(out2, ref2, atol=2e-5, rtol=2e-5), "tiled path mismatch vs reference"

    print("KERNEL_OK")
</pallas_src>

<mosaic_0001>
module attributes {stable_mosaic.version = 11 : i64} {
  func.func @_csa_fused_kernel(%arg0: i32, %arg1: memref<1x4x256xf32, #tpu.memory_space<vmem>>, %arg2: memref<2x4x4xf32, #tpu.memory_space<vmem>>, %arg3: memref<4x2xf32, #tpu.memory_space<vmem>>, %arg4: memref<1x4x256xf32, #tpu.memory_space<vmem>>) attributes {dimension_semantics = [#tpu.dimension_semantics<parallel>], iteration_bounds = array<i64: 2>, scalar_prefetch = 0 : i64, scratch_operands = 0 : i64, tpu.core_type = #tpu.core_type<tc>, window_params = [{transform_indices = @transform_0, window_bounds = array<i64: 1, 4, 256>}, {pipeline_mode = #tpu.pipeline_mode<synchronous>, transform_indices = @transform_1, window_bounds = array<i64: 2, 4, 4>}, {pipeline_mode = #tpu.pipeline_mode<synchronous>, transform_indices = @transform_2, window_bounds = array<i64: 4, 2>}, {transform_indices = @transform_3, window_bounds = array<i64: 1, 4, 256>}]} {
    %c0 = arith.constant 0 : index
    %c0_0 = arith.constant 0 : index
    %c0_1 = arith.constant 0 : index
    %0 = vector.load %arg2[%c0, %c0_0, %c0_1] : memref<2x4x4xf32, #tpu.memory_space<vmem>>, vector<1x4x4xf32>
    %1 = vector.shape_cast %0 : vector<1x4x4xf32> to vector<4x4xf32>
    %c1 = arith.constant 1 : index
    %c0_2 = arith.constant 0 : index
    %c0_3 = arith.constant 0 : index
    %2 = vector.load %arg2[%c1, %c0_2, %c0_3] : memref<2x4x4xf32, #tpu.memory_space<vmem>>, vector<1x4x4xf32>
    %3 = vector.shape_cast %2 : vector<1x4x4xf32> to vector<4x4xf32>
    %c0_4 = arith.constant 0 : index
    %c0_5 = arith.constant 0 : index
    %4 = vector.load %arg3[%c0_4, %c0_5] : memref<4x2xf32, #tpu.memory_space<vmem>>, vector<4x1xf32>
    %c0_6 = arith.constant 0 : index
    %c1_7 = arith.constant 1 : index
    %5 = vector.load %arg3[%c0_6, %c1_7] : memref<4x2xf32, #tpu.memory_space<vmem>>, vector<4x1xf32>
    %c0_8 = arith.constant 0 : index
    %c0_9 = arith.constant 0 : index
    %c0_10 = arith.constant 0 : index
    %6 = vector.load %arg1[%c0_8, %c0_9, %c0_10] : memref<1x4x256xf32, #tpu.memory_space<vmem>>, vector<1x4x256xf32>
    %7 = vector.shape_cast %6 : vector<1x4x256xf32> to vector<4x256xf32>
    %cst = arith.constant dense<0.000000e+00> : vector<4xf32>
    %8 = vector.multi_reduction <add>, %7, %cst [1] : vector<4x256xf32> to vector<4xf32>
    %9 = vector.shape_cast %8 : vector<4xf32> to vector<4x1xf32>
    %cst_11 = arith.constant 3.906250e-03 : f32
    %10 = vector.broadcast %cst_11 : f32 to vector<4x1xf32>
    %11 = arith.mulf %9, %10 : vector<4x1xf32>
    %cst_12 = arith.constant dense<0.000000e+00> : vector<4x1xf32>
    %12 = tpu.matmul %3, %11, %cst_12 {dimension_numbers = #tpu.dot_dimension_numbers<[1], [0], [0], [1], [0, 0, 1, 1], [], []>, precision = #tpu.contract_precision<fp32>} : vector<4x4xf32>, vector<4x1xf32>, vector<4x1xf32> -> vector<4x1xf32>
    %13 = arith.addf %12, %5 : vector<4x1xf32>
    %cst_13 = arith.constant 0.000000e+00 : f32
    %14 = vector.broadcast %cst_13 : f32 to vector<4x1xf32>
    %15 = arith.maximumf %13, %14 : vector<4x1xf32>
    %16 = arith.negf %15 : vector<4x1xf32>
    %17 = math.exp %16 : vector<4x1xf32>
    %cst_14 = arith.constant 1.000000e+00 : f32
    %18 = vector.broadcast %cst_14 : f32 to vector<4x1xf32>
    %19 = arith.addf %18, %17 : vector<4x1xf32>
    %20 = arith.divf %18, %19 : vector<4x1xf32>
    %cst_15 = arith.constant dense<0.000000e+00> : vector<4x256xf32>
    %21 = tpu.matmul %1, %7, %cst_15 {dimension_numbers = #tpu.dot_dimension_numbers<[1], [0], [0], [1], [0, 0, 1, 1], [], []>, precision = #tpu.contract_precision<fp32>} : vector<4x4xf32>, vector<4x256xf32>, vector<4x256xf32> -> vector<4x256xf32>
    %22 = vector.broadcast %4 : vector<4x1xf32> to vector<4x256xf32>
    %23 = arith.addf %21, %22 : vector<4x256xf32>
    %24 = arith.negf %23 : vector<4x256xf32>
    %25 = math.exp %24 : vector<4x256xf32>
    %cst_16 = arith.constant 1.000000e+00 : f32
    %26 = vector.broadcast %cst_16 : f32 to vector<4x256xf32>
    %27 = arith.addf %26, %25 : vector<4x256xf32>
    %28 = arith.divf %26, %27 : vector<4x256xf32>
    %29 = vector.broadcast %20 : vector<4x1xf32> to vector<4x256xf32>
    %30 = arith.addf %29, %28 : vector<4x256xf32>
    %31 = arith.mulf %7, %30 : vector<4x256xf32>
    %c0_17 = arith.constant 0 : index
    %c0_18 = arith.constant 0 : index
    %c0_19 = arith.constant 0 : index
    %32 = vector.load %arg4[%c0_17, %c0_18, %c0_19] : memref<1x4x256xf32, #tpu.memory_space<vmem>>, vector<1x4x256xf32>
    %33 = vector.shape_cast %32 : vector<1x4x256xf32> to vector<4x256xf32>
    %34 = vector.shape_cast %31 : vector<4x256xf32> to vector<1x4x256xf32>
    tpu.vector_store %arg4[%c0_17, %c0_18, %c0_19], %34 {strides = array<i32>} : memref<1x4x256xf32, #tpu.memory_space<vmem>>, vector<1x4x256xf32>,
    return
  }
  func.func @transform_0(%arg0: i32) -> (i32, i32, i32) {
    %c0_i32 = arith.constant 0 : i32
    %c0_i32_0 = arith.constant 0 : i32
    %c0_i32_1 = arith.constant 0 : i32
    return %arg0, %c0_i32, %c0_i32_0 : i32, i32, i32
  }
  func.func @transform_1(%arg0: i32) -> (i32, i32, i32) {
    %c0_i32 = arith.constant 0 : i32
    %c0_i32_0 = arith.constant 0 : i32
    %c0_i32_1 = arith.constant 0 : i32
    %c0_i32_2 = arith.constant 0 : i32
    return %c0_i32, %c0_i32_0, %c0_i32_1 : i32, i32, i32
  }
  func.func @transform_2(%arg0: i32) -> (i32, i32) {
    %c0_i32 = arith.constant 0 : i32
    %c0_i32_0 = arith.constant 0 : i32
    %c0_i32_1 = arith.constant 0 : i32
    return %c0_i32, %c0_i32_0 : i32, i32
  }
  func.func @transform_3(%arg0: i32) -> (i32, i32, i32) {
    %c0_i32 = arith.constant 0 : i32
    %c0_i32_0 = arith.constant 0 : i32
    %c0_i32_1 = arith.constant 0 : i32
    return %arg0, %c0_i32, %c0_i32_0 : i32, i32, i32
  }
}

</mosaic_0001>

<llo_original>
// kernel: tpu_custom_call.1
$region0: #{tpu_custom_call.1}
  #allocation0 [shape = 'u32[]', space=smem, size = 0x4, offset = 0x4, fixed_abs, tag = 'smem constant byte address 0x4 - core index']
  #allocation1 [shape = 'u32[144,128]{1,0:T(1,128)}', space=vmem, size = 0x12000, scoped, tag = 'internal scratch']
  %s0 = inlined_call_operand.hbm [shape: f32[2,4,256], index: 0, kind: input, shape index: {}]
  %s1 = inlined_call_operand.vmem [shape: f32[2,4,4], index: 1, kind: input, shape index: {}]
  %s2 = inlined_call_operand.vmem [shape: f32[4,2], index: 2, kind: input, shape index: {}]
  %s3 = inlined_call_operand.hbm [shape: f32[2,4,256], index: 3, kind: output, shape index: {}]
  %s4 = sld [smem:[#allocation0]]
  $region49: #{tpu_custom_call.1} parent=0
    _
  %s6 = ssub.s32 1, %s4
  %s7 = scalar_select 0, %s6, %s4
  $region1: #{tpu_custom_call.1} parent=0
    #allocation2 [shape = 'u8[8192]{0}', space=vmem, size = 0x2000, scoped, tag = 'input window, operand 0']
    #allocation3 [shape = 's32[2]{0}', space=sflag, size = 0x8, scoped, tag = 'scoped memory for tpu_custom_call.1']
    #allocation4 [shape = 's32[2]{0}', space=sflag, size = 0x8, scoped, tag = 'scoped memory for tpu_custom_call.1']
    #allocation5 [shape = 'u8[8192]{0}', space=vmem, size = 0x2000, scoped, tag = 'output window, operand 0']
    %8 = vsyncpa [#allocation3], 0
    %s9 = scalar_lea.sflag [#allocation3], 1
    %10 = vsyncpa %s9, 0
    %11 = vsyncpa [#allocation4], 0
    %s12 = scalar_lea.sflag [#allocation4], 1
    %13 = vsyncpa %s12, 0
    loop: start=0, step=1, limit=4
    $region2: #{tpu_custom_call.1} parent=1 // loop_pre_header
      _
    $region3: #{tpu_custom_call.1} parent=1 // loop_header
      %s15 = sphi 0, %s19
      %p16 = scmp.ge.s32.totalorder %s15, 4
      %s25 = sphi 0, %s27
      %s28 = sphi 0, %s25
      %s29 = sphi 0, %s28
      %s45 = sphi 0, %s29
      %s49 = sphi 0, %s49
      %s51 = sphi 0, %s49
      %s52 = sphi 0, %s51
      %s66 = sphi 0, %s52
      %s70 = sphi 0, %s70
      %s72 = sphi 0, %s70
      %s73 = sphi 0, %s72
      %s87 = sphi 0, %s73
      %s93 = sphi 0, %s95
      %s96 = sphi 0, %s93
      %s97 = sphi 0, %s96
      %s113 = sphi 0, %s97
    $region4: #{tpu_custom_call.1} parent=1 // loop_header_branch
      %18 = sbr.rel (%p16) target = $region8
    $region5: #{tpu_custom_call.1} parent=1 // loop_body
      %s20 = ssub.s32 %s15, 1
      %s21 = ssub.s32 %s15, 2
      %s22 = sadd.s32 %s15, 1
      %s23 = ssub.s32 %s15, %s22
      %p24 = scmp.eq.s32.totalorder %s23, 0
      %s26 = sadd.s32 %s25, 1
      %s27 = scalar_select %p24, %s25, %s26
      %p30 = pneg %p24
      %p31 = scmp.eq.s32.totalorder %s15, 1
      %p32 = por %p30, %p31
      %p33 = scmp.ne.s32.totalorder %s25, %s28
      %p34 = scmp.eq.s32.totalorder %s15, 0
      %p35 = por %p33, %p34
      %p36 = scmp.ne.s32.totalorder %s25, %s28
      %p37 = scmp.eq.s32.totalorder %s20, 1
      %p38 = por %p36, %p37
      %p39 = scmp.ne.s32.totalorder %s28, %s29
      %p40 = scmp.eq.s32.totalorder %s20, 0
      %p41 = por %p39, %p40
      %p42 = scmp.ne.s32.totalorder %s28, %s29
      %p43 = scmp.eq.s32.totalorder %s21, 1
      %p44 = por %p42, %p43
      %p46 = scmp.ne.s32.totalorder %s29, %s45
      %p47 = scmp.eq.s32.totalorder %s21, 0
      %p48 = por %p46, %p47
      %s50 = sadd.s32 %s49, 1
      %p53 = scmp.eq.s32.totalorder %s15, 1
      %p54 = scmp.ne.s32.totalorder %s49, %s51
      %p55 = scmp.eq.s32.totalorder %s15, 0
      %p56 = por %p54, %p55
      %p57 = scmp.ne.s32.totalorder %s49, %s51
      %p58 = scmp.eq.s32.totalorder %s20, 1
      %p59 = por %p57, %p58
      %p60 = scmp.ne.s32.totalorder %s51, %s52
      %p61 = scmp.eq.s32.totalorder %s20, 0
      %p62 = por %p60, %p61
      %p63 = scmp.ne.s32.totalorder %s51, %s52
      %p64 = scmp.eq.s32.totalorder %s21, 1
      %p65 = por %p63, %p64
      %p67 = scmp.ne.s32.totalorder %s52, %s66
      %p68 = scmp.eq.s32.totalorder %s21, 0
      %p69 = por %p67, %p68
      %s71 = sadd.s32 %s70, 1
      %p74 = scmp.eq.s32.totalorder %s15, 1
      %p75 = scmp.ne.s32.totalorder %s70, %s72
      %p76 = scmp.eq.s32.totalorder %s15, 0
      %p77 = por %p75, %p76
      %p78 = scmp.ne.s32.totalorder %s70, %s72
      %p79 = scmp.eq.s32.totalorder %s20, 1
      %p80 = por %p78, %p79
      %p81 = scmp.ne.s32.totalorder %s72, %s73
      %p82 = scmp.eq.s32.totalorder %s20, 0
      %p83 = por %p81, %p82
      %p84 = scmp.ne.s32.totalorder %s72, %s73
      %p85 = scmp.eq.s32.totalorder %s21, 1
      %p86 = por %p84, %p85
      %p88 = scmp.ne.s32.totalorder %s73, %s87
      %p89 = scmp.eq.s32.totalorder %s21, 0
      %p90 = por %p88, %p89
      %s91 = ssub.s32 %s15, %s22
      %p92 = scmp.eq.s32.totalorder %s91, 0
      %s94 = sadd.s32 %s93, 1
      %s95 = scalar_select %p92, %s93, %s94
      %p98 = pneg %p92
      %p99 = scmp.eq.s32.totalorder %s15, 1
      %p100 = por %p98, %p99
      %p101 = scmp.ne.s32.totalorder %s93, %s96
      %p102 = scmp.eq.s32.totalorder %s15, 0
      %p103 = por %p101, %p102
      %p104 = scmp.ne.s32.totalorder %s93, %s96
      %p105 = scmp.eq.s32.totalorder %s20, 1
      %p106 = por %p104, %p105
      %p107 = scmp.ne.s32.totalorder %s96, %s97
      %p108 = scmp.eq.s32.totalorder %s20, 0
      %p109 = por %p107, %p108
      %p110 = scmp.ne.s32.totalorder %s96, %s97
      %p111 = scmp.eq.s32.totalorder %s21, 1
      %p112 = por %p110, %p111
      %p114 = scmp.ne.s32.totalorder %s97, %s113
      %p115 = scmp.eq.s32.totalorder %s21, 0
      %p116 = por %p114, %p115
      %p117 = scmp.le.s32.totalorder 1, %s15
      %p118 = scmp.lt.s32.totalorder %s15, 3
      %p119 = pnand %p117, %p118
      %p120 = pneg %p119
      // Predicated region
      $region9: #{tpu_custom_call.1} parent=5 // pred_check
        _
      $region10: #{tpu_custom_call.1} parent=5 // pred_check_branch
        %122 = sbr.rel (%p119) target = $region12
      $region11: #{tpu_custom_call.1} parent=5 // pred_region
        %s123 = ssub.s32 %s15, 1
        // Predicated region
        $region13: #{tpu_custom_call.1} parent=11 // pred_check
          %p124 = pneg %p62
        $region14: #{tpu_custom_call.1} parent=11 // pred_check_branch
          %126 = sbr.rel (%p124) target = $region16
        $region15: #{tpu_custom_call.1} parent=11 // pred_region
          _
        $region16: #{tpu_custom_call.1} parent=11 // pred_fallthru
          _
        // Predicated region
        $region17: #{tpu_custom_call.1} parent=11 // pred_check
          %p127 = pneg %p83
        $region18: #{tpu_custom_call.1} parent=11 // pred_check_branch
          %129 = sbr.rel (%p127) target = $region20
        $region19: #{tpu_custom_call.1} parent=11 // pred_region
          _
        $region20: #{tpu_custom_call.1} parent=11 // pred_fallthru
          _
      $region12: #{tpu_custom_call.1} parent=5 // pred_fallthru
        _
      %p130 = scmp.lt.s32.totalorder %s15, 2
      // Predicated region
      $region21: #{tpu_custom_call.1} parent=5 // pred_check
        %p131 = pneg %p130
      $region22: #{tpu_custom_call.1} parent=5 // pred_check_branch
        %133 = sbr.rel (%p131) target = $region24
      $region23: #{tpu_custom_call.1} parent=5 // pred_region
        // Predicated region
        $region25: #{tpu_custom_call.1} parent=23 // pred_check
          %p134 = pneg %p35
        $region26: #{tpu_custom_call.1} parent=23 // pred_check_branch
          %136 = sbr.rel (%p134) target = $region28
        $region27: #{tpu_custom_call.1} parent=23 // pred_region
          %s137 = sand.u32 %s25, 1
          %s138 = scalar_lea.sflag [#allocation3], %s137
          %s139 = sand.u32 %s25, 1
          %s140 = smul.addr %s139, 8
          %s141 = scalar_lea.vmem [#allocation2], %s140
          %s143 = ssub.s32 128, 128
          %144 = vsyncadd %s138, %s143
          %s145 = smul.addr %s15, 2
          %s146 = smul.addr %s145, 64
          %s147 = scalar_lea.hbm %s0, %s146
          %s149 = sshll.u32 %s141, 4
          %s150 = int_to_ptr.vmem [resolvable:$true] %s149
          %152 = dma.hbm_to_vmem [thread:$0]  %s147, 128, %s150, %s138
        $region28: #{tpu_custom_call.1} parent=23 // pred_fallthru
          _
      $region24: #{tpu_custom_call.1} parent=5 // pred_fallthru
        _
      %p153 = scmp.le.s32.totalorder 1, %s15
      %p154 = scmp.lt.s32.totalorder %s15, 3
      %p155 = pnand %p153, %p154
      %p156 = pneg %p155
      // Predicated region
      $region29: #{tpu_custom_call.1} parent=5 // pred_check
        _
      $region30: #{tpu_custom_call.1} parent=5 // pred_check_branch
        %158 = sbr.rel (%p155) target = $region32
      $region31: #{tpu_custom_call.1} parent=5 // pred_region
        %s159 = ssub.s32 %s15, 1
        %s160 = sand.u32 %s28, 1
        %s161 = scalar_lea.sflag [#allocation3], %s160
        %s162 = sand.u32 %s28, 1
        %s163 = smul.addr %s162, 8
        %s164 = scalar_lea.vmem [#allocation2], %s163
        // Predicated region
        $region33: #{tpu_custom_call.1} parent=31 // pred_check
          %p165 = pneg %p41
        $region34: #{tpu_custom_call.1} parent=31 // pred_check_branch
          %167 = sbr.rel (%p165) target = $region36
        $region35: #{tpu_custom_call.1} parent=31 // pred_region
          %168 = dma.done %s161, 128
        $region36: #{tpu_custom_call.1} parent=31 // pred_fallthru
          _
        %s169 = sand.u32 %s28, 1
        %s170 = scalar_lea.sflag [#allocation3], %s169
        %s171 = sand.u32 %s28, 1
        %s172 = smul.addr %s171, 8
        %s173 = scalar_lea.vmem [#allocation2], %s172
        %p174 = pneg %p41
        %p175 = pneg %p38
        %p176 = pneg %p62
        %p177 = pneg %p59
        %p178 = pneg %p83
        %p179 = pneg %p80
        %p180 = pneg %p109
        %p181 = pneg %p106
        %s182 = sand.u32 %s96, 1
        %s183 = scalar_lea.sflag [#allocation4], %s182
        %s184 = sand.u32 %s96, 1
        %s185 = smul.addr %s184, 8
        %s186 = scalar_lea.vmem [#allocation5], %s185
        %v187 = vld [vmem:[%s1] sm:$0xf]
        %s188 = scalar_lea.vmem %s1, 4
        %v189 = vld [vmem:[%s188] sm:$0xf]
        %v190 = vld [vmem:[%s2] sm:$0xf]
        %v191 = vld [vmem:[%s164] sm:$0xff]
        %v193 = vcombine.high %v191, %v191
        %vm195 = vcmask 1043456
        %v196 = vsel %vm195, %v191, 0.0
        %v197 = vsel %vm195, %v193, 0.0
        %v198 = vadd.f32 %v196, %v197
        %199 = vadd.xlane.f32.xlu0 %v198
        %v200 = vpop.xlane.xlu0 %199
        %v201 = vmul.f32 %v200, 0.00390625
        %203 = vrot.lane.b32.xlu0 %v190, 127
        %v204 = vpop.permute.xlu0 %203
        %vm206 = vcmask 31744
        %v208 = vsel %vm206, %v189, 0
        %v211 = vsel %vm195, %v201, 0
        %213 = vmatprep.subr.mxu0 0.0
        %v214 = vand.u32 %v211, 4294901760
        %215 = vmatpush1.msra.mxu0 %v214
        %216 = vmatprep.subr.mxu0 0.0
        %217 = vmatpush1.msra.mxu0 0.0
        %218 = vmatprep.subr.mxu0 0.0
        %219 = vmatpush1.msra.mxu0 0.0
        %220 = vmatprep.subr.mxu0 0.0
        %221 = vmatpush1.msra.mxu0 0.0
        %222 = vmatprep.subr.mxu0 0.0
        %223 = vmatpush1.msra.mxu0 0.0
        %224 = vmatprep.subr.mxu0 0.0
        %225 = vmatpush1.msra.mxu0 0.0
        %226 = vmatprep.subr.mxu0 0.0
        %227 = vmatpush1.msra.mxu0 0.0
        %228 = vmatprep.subr.mxu0 0.0
        %229 = vmatpush1.msra.mxu0 0.0
        %230 = vmatprep.subr.mxu0 0.0
        %231 = vmatpush1.msra.mxu0 0.0
        %232 = vmatprep.subr.mxu0 0.0
        %233 = vmatpush1.msra.mxu0 0.0
        %234 = vmatprep.subr.mxu0 0.0
        %235 = vmatpush1.msra.mxu0 0.0
        %236 = vmatprep.subr.mxu0 0.0
        %237 = vmatpush1.msra.mxu0 0.0
        %238 = vmatprep.subr.mxu0 0.0
        %239 = vmatpush1.msra.mxu0 0.0
        %240 = vmatprep.subr.mxu0 0.0
        %241 = vmatpush1.msra.mxu0 0.0
        %242 = vmatprep.subr.mxu0 0.0
        %243 = vmatpush1.msra.mxu0 0.0
        %244 = vmatprep.subr.mxu0 0.0
        %245 = vmatpush1.msra.mxu0 0.0
        %246 = vmatprep.subr.mxu0 0.0
        %247 = vmatpush1.msra.mxu0 0.0
        %248 = vmatprep.subr.mxu0 0.0
        %249 = vmatpush1.msra.mxu0 0.0
        %250 = vmatprep.subr.mxu0 0.0
        %251 = vmatpush1.msra.mxu0 0.0
        %252 = vmatprep.subr.mxu0 0.0
        %253 = vmatpush1.msra.mxu0 0.0
        %254 = vmatprep.subr.mxu0 0.0
        %255 = vmatpush1.msra.mxu0 0.0
        %256 = vmatprep.subr.mxu0 0.0
        %257 = vmatpush1.msra.mxu0 0.0
        %258 = vmatprep.subr.mxu0 0.0
        %259 = vmatpush1.msra.mxu0 0.0
        %260 = vmatprep.subr.mxu0 0.0
        %261 = vmatpush1.msra.mxu0 0.0
        %262 = vmatprep.subr.mxu0 0.0
        %263 = vmatpush1.msra.mxu0 0.0
        %264 = vmatprep.subr.mxu0 0.0
        %265 = vmatpush1.msra.mxu0 0.0
        %266 = vmatprep.subr.mxu0 0.0
        %267 = vmatpush1.msra.mxu0 0.0
        %268 = vmatprep.subr.mxu0 0.0
        %269 = vmatpush1.msra.mxu0 0.0
        %270 = vmatprep.subr.mxu0 0.0
        %271 = vmatpush1.msra.mxu0 0.0
        %272 = vmatprep.subr.mxu0 0.0
        %273 = vmatpush1.msra.mxu0 0.0
        %274 = vmatprep.subr.mxu0 0.0
        %275 = vmatpush1.msra.mxu0 0.0
        %276 = vmatprep.subr.mxu0 0.0
        %277 = vmatpush1.msra.mxu0 0.0
        %278 = vmatprep.mubr.f32.mxu0 0.0
        %v279 = vand.u32 %v208, 4294901760
        %v280 = vsub.f32 %v208, %v279
        %v281 = vand.u32 %v280, 4294901760
        %v282 = vsub.f32 %v280, %v281
        %v283 = vand.u32 %v282, 4294901760
        %284 = vmatmul.mubr.f32.gmra.mrb[0].mxu0 %v283
        %v285 = vpop.f32.mrb[0].mxu0
        %v286 = vadd.f32 %v204, %v285
        %v287 = vpop.f32.mrb[0].mxu0
        %288 = vdwg.mxu0
        %289 = vmatprep.subr.mxu0 0.0
        %v290 = vand.u32 %v211, 4294901760
        %v291 = vsub.f32 %v211, %v290
        %v292 = vand.u32 %v291, 4294901760
        %v293 = vsub.f32 %v291, %v292
        %v294 = vand.u32 %v293, 4294901760
        %295 = vmatpush1.msra.mxu0 %v294
        %296 = vmatprep.subr.mxu0 0.0
        %297 = vmatpush1.msra.mxu0 0.0
        %298 = vmatprep.subr.mxu0 0.0
        %299 = vmatpush1.msra.mxu0 0.0
        %300 = vmatprep.subr.mxu0 0.0
        %301 = vmatpush1.msra.mxu0 0.0
        %302 = vmatprep.subr.mxu0 0.0
        %303 = vmatpush1.msra.mxu0 0.0
        %304 = vmatprep.subr.mxu0 0.0
        %305 = vmatpush1.msra.mxu0 0.0
        %306 = vmatprep.subr.mxu0 0.0
        %307 = vmatpush1.msra.mxu0 0.0
        %308 = vmatprep.subr.mxu0 0.0
        %309 = vmatpush1.msra.mxu0 0.0
        %310 = vmatprep.subr.mxu0 0.0
        %311 = vmatpush1.msra.mxu0 0.0
        %312 = vmatprep.subr.mxu0 0.0
        %313 = vmatpush1.msra.mxu0 0.0
        %314 = vmatprep.subr.mxu0 0.0
        %315 = vmatpush1.msra.mxu0 0.0
        %316 = vmatprep.subr.mxu0 0.0
        %317 = vmatpush1.msra.mxu0 0.0
        %318 = vmatprep.subr.mxu0 0.0
        %319 = vmatpush1.msra.mxu0 0.0
        %320 = vmatprep.subr.mxu0 0.0
        %321 = vmatpush1.msra.mxu0 0.0
        %322 = vmatprep.subr.mxu0 0.0
        %323 = vmatpush1.msra.mxu0 0.0
        %324 = vmatprep.subr.mxu0 0.0
        %325 = vmatpush1.msra.mxu0 0.0
        %326 = vmatprep.subr.mxu0 0.0
        %327 = vmatpush1.msra.mxu0 0.0
        %328 = vmatprep.subr.mxu0 0.0
        %329 = vmatpush1.msra.mxu0 0.0
        %330 = vmatprep.subr.mxu0 0.0
        %331 = vmatpush1.msra.mxu0 0.0
        %332 = vmatprep.subr.mxu0 0.0
        %333 = vmatpush1.msra.mxu0 0.0
        %334 = vmatprep.subr.mxu0 0.0
        %335 = vmatpush1.msra.mxu0 0.0
        %336 = vmatprep.subr.mxu0 0.0
        %337 = vmatpush1.msra.mxu0 0.0
        %338 = vmatprep.subr.mxu0 0.0
        %339 = vmatpush1.msra.mxu0 0.0
        %340 = vmatprep.subr.mxu0 0.0
        %341 = vmatpush1.msra.mxu0 0.0
        %342 = vmatprep.subr.mxu0 0.0
        %343 = vmatpush1.msra.mxu0 0.0
        %344 = vmatprep.subr.mxu0 0.0
        %345 = vmatpush1.msra.mxu0 0.0
        %346 = vmatprep.subr.mxu0 0.0
        %347 = vmatpush1.msra.mxu0 0.0
        %348 = vmatprep.subr.mxu0 0.0
        %349 = vmatpush1.msra.mxu0 0.0
        %350 = vmatprep.subr.mxu0 0.0
        %351 = vmatpush1.msra.mxu0 0.0
        %352 = vmatprep.subr.mxu0 0.0
        %353 = vmatpush1.msra.mxu0 0.0
        %354 = vmatprep.subr.mxu0 0.0
        %355 = vmatpush1.msra.mxu0 0.0
        %356 = vmatprep.subr.mxu0 0.0
        %357 = vmatpush1.msra.mxu0 0.0
        %358 = vmatprep.mubr.f32.mxu0 0.0
        %v359 = vand.u32 %v208, 4294901760
        %360 = vmatmul.mubr.f32.gmra.mrb[0].mxu0 %v359
        %v361 = vpop.f32.mrb[0].mxu0
        %v362 = vadd.f32 %v286, %v361
        %v363 = vpop.f32.mrb[0].mxu0
        %364 = vdwg.mxu0
        %365 = vmatprep.subr.mxu0 0.0
        %v366 = vand.u32 %v211, 4294901760
        %v367 = vsub.f32 %v211, %v366
        %368 = vmatpush1.msra.mxu0 %v367
        %369 = vmatprep.subr.mxu0 0.0
        %370 = vmatpush1.msra.mxu0 0.0
        %371 = vmatprep.subr.mxu0 0.0
        %372 = vmatpush1.msra.mxu0 0.0
        %373 = vmatprep.subr.mxu0 0.0
        %374 = vmatpush1.msra.mxu0 0.0
        %375 = vmatprep.subr.mxu0 0.0
        %376 = vmatpush1.msra.mxu0 0.0
        %377 = vmatprep.subr.mxu0 0.0
        %378 = vmatpush1.msra.mxu0 0.0
        %379 = vmatprep.subr.mxu0 0.0
        %380 = vmatpush1.msra.mxu0 0.0
        %381 = vmatprep.subr.mxu0 0.0
        %382 = vmatpush1.msra.mxu0 0.0
        %383 = vmatprep.subr.mxu0 0.0
        %384 = vmatpush1.msra.mxu0 0.0
        %385 = vmatprep.subr.mxu0 0.0
        %386 = vmatpush1.msra.mxu0 0.0
        %387 = vmatprep.subr.mxu0 0.0
        %388 = vmatpush1.msra.mxu0 0.0
        %389 = vmatprep.subr.mxu0 0.0
        %390 = vmatpush1.msra.mxu0 0.0
        %391 = vmatprep.subr.mxu0 0.0
        %392 = vmatpush1.msra.mxu0 0.0
        %393 = vmatprep.subr.mxu0 0.0
        %394 = vmatpush1.msra.mxu0 0.0
        %395 = vmatprep.subr.mxu0 0.0
        %396 = vmatpush1.msra.mxu0 0.0
        %397 = vmatprep.subr.mxu0 0.0
        %398 = vmatpush1.msra.mxu0 0.0
        %399 = vmatprep.subr.mxu0 0.0
        %400 = vmatpush1.msra.mxu0 0.0
        %401 = vmatprep.subr.mxu0 0.0
        %402 = vmatpush1.msra.mxu0 0.0
        %403 = vmatprep.subr.mxu0 0.0
        %404 = vmatpush1.msra.mxu0 0.0
        %405 = vmatprep.subr.mxu0 0.0
        %406 = vmatpush1.msra.mxu0 0.0
        %407 = vmatprep.subr.mxu0 0.0
        %408 = vmatpush1.msra.mxu0 0.0
        %409 = vmatprep.subr.mxu0 0.0
        %410 = vmatpush1.msra.mxu0 0.0
        %411 = vmatprep.subr.mxu0 0.0
        %412 = vmatpush1.msra.mxu0 0.0
        %413 = vmatprep.subr.mxu0 0.0
        %414 = vmatpush1.msra.mxu0 0.0
        %415 = vmatprep.subr.mxu0 0.0
        %416 = vmatpush1.msra.mxu0 0.0
        %417 = vmatprep.subr.mxu0 0.0
        %418 = vmatpush1.msra.mxu0 0.0
        %419 = vmatprep.subr.mxu0 0.0
        %420 = vmatpush1.msra.mxu0 0.0
        %421 = vmatprep.subr.mxu0 0.0
        %422 = vmatpush1.msra.mxu0 0.0
        %423 = vmatprep.subr.mxu0 0.0
        %424 = vmatpush1.msra.mxu0 0.0
        %425 = vmatprep.subr.mxu0 0.0
        %426 = vmatpush1.msra.mxu0 0.0
        %427 = vmatprep.subr.mxu0 0.0
        %428 = vmatpush1.msra.mxu0 0.0
        %429 = vmatprep.subr.mxu0 0.0
        %430 = vmatpush1.msra.mxu0 0.0
        %431 = vmatprep.mubr.f32.mxu0 0.0
        %v432 = vand.u32 %v208, 4294901760
        %v433 = vsub.f32 %v208, %v432
        %434 = vmatmul.mubr.f32.gmra.mrb[0].mxu0 %v433
        %v435 = vpop.f32.mrb[0].mxu0
        %v436 = vadd.f32 %v362, %v435
        %v437 = vpop.f32.mrb[0].mxu0
        %438 = vdwg.mxu0
        %439 = vmatprep.subr.mxu0 0.0
        %v440 = vand.u32 %v211, 4294901760
        %441 = vmatpush1.msra.mxu0 %v440
        %442 = vmatprep.subr.mxu0 0.0
        %443 = vmatpush1.msra.mxu0 0.0
        %444 = vmatprep.subr.mxu0 0.0
        %445 = vmatpush1.msra.mxu0 0.0
        %446 = vmatprep.subr.mxu0 0.0
        %447 = vmatpush1.msra.mxu0 0.0
        %448 = vmatprep.subr.mxu0 0.0
        %449 = vmatpush1.msra.mxu0 0.0
        %450 = vmatprep.subr.mxu0 0.0
        %451 = vmatpush1.msra.mxu0 0.0
        %452 = vmatprep.subr.mxu0 0.0
        %453 = vmatpush1.msra.mxu0 0.0
        %454 = vmatprep.subr.mxu0 0.0
        %455 = vmatpush1.msra.mxu0 0.0
        %456 = vmatprep.subr.mxu0 0.0
        %457 = vmatpush1.msra.mxu0 0.0
        %458 = vmatprep.subr.mxu0 0.0
        %459 = vmatpush1.msra.mxu0 0.0
        %460 = vmatprep.subr.mxu0 0.0
        %461 = vmatpush1.msra.mxu0 0.0
        %462 = vmatprep.subr.mxu0 0.0
        %463 = vmatpush1.msra.mxu0 0.0
        %464 = vmatprep.subr.mxu0 0.0
        %465 = vmatpush1.msra.mxu0 0.0
        %466 = vmatprep.subr.mxu0 0.0
        %467 = vmatpush1.msra.mxu0 0.0
        %468 = vmatprep.subr.mxu0 0.0
        %469 = vmatpush1.msra.mxu0 0.0
        %470 = vmatprep.subr.mxu0 0.0
        %471 = vmatpush1.msra.mxu0 0.0
        %472 = vmatprep.subr.mxu0 0.0
        %473 = vmatpush1.msra.mxu0 0.0
        %474 = vmatprep.subr.mxu0 0.0
        %475 = vmatpush1.msra.mxu0 0.0
        %476 = vmatprep.subr.mxu0 0.0
        %477 = vmatpush1.msra.mxu0 0.0
        %478 = vmatprep.subr.mxu0 0.0
        %479 = vmatpush1.msra.mxu0 0.0
        %480 = vmatprep.subr.mxu0 0.0
        %481 = vmatpush1.msra.mxu0 0.0
        %482 = vmatprep.subr.mxu0 0.0
        %483 = vmatpush1.msra.mxu0 0.0
        %484 = vmatprep.subr.mxu0 0.0
        %485 = vmatpush1.msra.mxu0 0.0
        %486 = vmatprep.subr.mxu0 0.0
        %487 = vmatpush1.msra.mxu0 0.0
        %488 = vmatprep.subr.mxu0 0.0
        %489 = vmatpush1.msra.mxu0 0.0
        %490 = vmatprep.subr.mxu0 0.0
        %491 = vmatpush1.msra.mxu0 0.0
        %492 = vmatprep.subr.mxu0 0.0
        %493 = vmatpush1.msra.mxu0 0.0
        %494 = vmatprep.subr.mxu0 0.0
        %495 = vmatpush1.msra.mxu0 0.0
        %496 = vmatprep.subr.mxu0 0.0
        %497 = vmatpush1.msra.mxu0 0.0
        %498 = vmatprep.subr.mxu0 0.0
        %499 = vmatpush1.msra.mxu0 0.0
        %500 = vmatprep.subr.mxu0 0.0
        %501 = vmatpush1.msra.mxu0 0.0
        %502 = vmatprep.subr.mxu0 0.0
        %503 = vmatpush1.msra.mxu0 0.0
        %504 = vmatprep.mubr.f32.mxu0 0.0
        %v505 = vand.u32 %v208, 4294901760
        %v506 = vsub.f32 %v208, %v505
        %v507 = vand.u32 %v506, 4294901760
        %508 = vmatmul.mubr.f32.gmra.mrb[0].mxu0 %v507
        %v509 = vpop.f32.mrb[0].mxu0
        %v510 = vadd.f32 %v436, %v509
        %v511 = vpop.f32.mrb[0].mxu0
        %512 = vdwg.mxu0
        %513 = vmatprep.subr.mxu0 0.0
        %v514 = vand.u32 %v211, 4294901760
        %v515 = vsub.f32 %v211, %v514
        %v516 = vand.u32 %v515, 4294901760
        %517 = vmatpush1.msra.mxu0 %v516
        %518 = vmatprep.subr.mxu0 0.0
        %519 = vmatpush1.msra.mxu0 0.0
        %520 = vmatprep.subr.mxu0 0.0
        %521 = vmatpush1.msra.mxu0 0.0
        %522 = vmatprep.subr.mxu0 0.0
        %523 = vmatpush1.msra.mxu0 0.0
        %524 = vmatprep.subr.mxu0 0.0
        %525 = vmatpush1.msra.mxu0 0.0
        %526 = vmatprep.subr.mxu0 0.0
        %527 = vmatpush1.msra.mxu0 0.0
        %528 = vmatprep.subr.mxu0 0.0
        %529 = vmatpush1.msra.mxu0 0.0
        %530 = vmatprep.subr.mxu0 0.0
        %531 = vmatpush1.msra.mxu0 0.0
        %532 = vmatprep.subr.mxu0 0.0
        %533 = vmatpush1.msra.mxu0 0.0
        %534 = vmatprep.subr.mxu0 0.0
        %535 = vmatpush1.msra.mxu0 0.0
        %536 = vmatprep.subr.mxu0 0.0
        %537 = vmatpush1.msra.mxu0 0.0
        %538 = vmatprep.subr.mxu0 0.0
        %539 = vmatpush1.msra.mxu0 0.0
        %540 = vmatprep.subr.mxu0 0.0
        %541 = vmatpush1.msra.mxu0 0.0
        %542 = vmatprep.subr.mxu0 0.0
        %543 = vmatpush1.msra.mxu0 0.0
        %544 = vmatprep.subr.mxu0 0.0
        %545 = vmatpush1.msra.mxu0 0.0
        %546 = vmatprep.subr.mxu0 0.0
        %547 = vmatpush1.msra.mxu0 0.0
        %548 = vmatprep.subr.mxu0 0.0
        %549 = vmatpush1.msra.mxu0 0.0
        %550 = vmatprep.subr.mxu0 0.0
        %551 = vmatpush1.msra.mxu0 0.0
        %552 = vmatprep.subr.mxu0 0.0
        %553 = vmatpush1.msra.mxu0 0.0
        %554 = vmatprep.subr.mxu0 0.0
        %555 = vmatpush1.msra.mxu0 0.0
        %556 = vmatprep.subr.mxu0 0.0
        %557 = vmatpush1.msra.mxu0 0.0
        %558 = vmatprep.subr.mxu0 0.0
        %559 = vmatpush1.msra.mxu0 0.0
        %560 = vmatprep.subr.mxu0 0.0
        %561 = vmatpush1.msra.mxu0 0.0
        %562 = vmatprep.subr.mxu0 0.0
        %563 = vmatpush1.msra.mxu0 0.0
        %564 = vmatprep.subr.mxu0 0.0
        %565 = vmatpush1.msra.mxu0 0.0
        %566 = vmatprep.subr.mxu0 0.0
        %567 = vmatpush1.msra.mxu0 0.0
        %568 = vmatprep.subr.mxu0 0.0
        %569 = vmatpush1.msra.mxu0 0.0
        %570 = vmatprep.subr.mxu0 0.0
        %571 = vmatpush1.msra.mxu0 0.0
        %572 = vmatprep.subr.mxu0 0.0
        %573 = vmatpush1.msra.mxu0 0.0
        %574 = vmatprep.subr.mxu0 0.0
        %575 = vmatpush1.msra.mxu0 0.0
        %576 = vmatprep.subr.mxu0 0.0
        %577 = vmatpush1.msra.mxu0 0.0
        %578 = vmatprep.subr.mxu0 0.0
        %579 = vmatpush1.msra.mxu0 0.0
        %580 = vmatprep.mubr.f32.mxu0 0.0
        %v581 = vand.u32 %v208, 4294901760
        %582 = vmatmul.mubr.f32.gmra.mrb[0].mxu0 %v581
        %v583 = vpop.f32.mrb[0].mxu0
        %v584 = vadd.f32 %v510, %v583
        %v585 = vpop.f32.mrb[0].mxu0
        %586 = vdwg.mxu0
        %587 = vmatprep.subr.mxu0 0.0
        %v588 = vand.u32 %v211, 4294901760
        %589 = vmatpush1.msra.mxu0 %v588
        %590 = vmatprep.subr.mxu0 0.0
        %591 = vmatpush1.msra.mxu0 0.0
        %592 = vmatprep.subr.mxu0 0.0
        %593 = vmatpush1.msra.mxu0 0.0
        %594 = vmatprep.subr.mxu0 0.0
        %595 = vmatpush1.msra.mxu0 0.0
        %596 = vmatprep.subr.mxu0 0.0
        %597 = vmatpush1.msra.mxu0 0.0
        %598 = vmatprep.subr.mxu0 0.0
        %599 = vmatpush1.msra.mxu0 0.0
        %600 = vmatprep.subr.mxu0 0.0
        %601 = vmatpush1.msra.mxu0 0.0
        %602 = vmatprep.subr.mxu0 0.0
        %603 = vmatpush1.msra.mxu0 0.0
        %604 = vmatprep.subr.mxu0 0.0
        %605 = vmatpush1.msra.mxu0 0.0
        %606 = vmatprep.subr.mxu0 0.0
        %607 = vmatpush1.msra.mxu0 0.0
        %608 = vmatprep.subr.mxu0 0.0
        %609 = vmatpush1.msra.mxu0 0.0
        %610 = vmatprep.subr.mxu0 0.0
        %611 = vmatpush1.msra.mxu0 0.0
        %612 = vmatprep.subr.mxu0 0.0
        %613 = vmatpush1.msra.mxu0 0.0
        %614 = vmatprep.subr.mxu0 0.0
        %615 = vmatpush1.msra.mxu0 0.0
        %616 = vmatprep.subr.mxu0 0.0
        %617 = vmatpush1.msra.mxu0 0.0
        %618 = vmatprep.subr.mxu0 0.0
        %619 = vmatpush1.msra.mxu0 0.0
        %620 = vmatprep.subr.mxu0 0.0
        %621 = vmatpush1.msra.mxu0 0.0
        %622 = vmatprep.subr.mxu0 0.0
        %623 = vmatpush1.msra.mxu0 0.0
        %624 = vmatprep.subr.mxu0 0.0
        %625 = vmatpush1.msra.mxu0 0.0
        %626 = vmatprep.subr.mxu0 0.0
        %627 = vmatpush1.msra.mxu0 0.0
        %628 = vmatprep.subr.mxu0 0.0
        %629 = vmatpush1.msra.mxu0 0.0
        %630 = vmatprep.subr.mxu0 0.0
        %631 = vmatpush1.msra.mxu0 0.0
        %632 = vmatprep.subr.mxu0 0.0
        %633 = vmatpush1.msra.mxu0 0.0
        %634 = vmatprep.subr.mxu0 0.0
        %635 = vmatpush1.msra.mxu0 0.0
        %636 = vmatprep.subr.mxu0 0.0
        %637 = vmatpush1.msra.mxu0 0.0
        %638 = vmatprep.subr.mxu0 0.0
        %639 = vmatpush1.msra.mxu0 0.0
        %640 = vmatprep.subr.mxu0 0.0
        %641 = vmatpush1.msra.mxu0 0.0
        %642 = vmatprep.subr.mxu0 0.0
        %643 = vmatpush1.msra.mxu0 0.0
        %644 = vmatprep.subr.mxu0 0.0
        %645 = vmatpush1.msra.mxu0 0.0
        %646 = vmatprep.subr.mxu0 0.0
        %647 = vmatpush1.msra.mxu0 0.0
        %648 = vmatprep.subr.mxu0 0.0
        %649 = vmatpush1.msra.mxu0 0.0
        %650 = vmatprep.subr.mxu0 0.0
        %651 = vmatpush1.msra.mxu0 0.0
        %652 = vmatprep.mubr.f32.mxu0 0.0
        %v653 = vand.u32 %v208, 4294901760
        %654 = vmatmul.mubr.f32.gmra.mrb[0].mxu0 %v653
        %v655 = vpop.f32.mrb[0].mxu0
        %v656 = vadd.f32 %v584, %v655
        %v657 = vpop.f32.mrb[0].mxu0
        %658 = vdwg.mxu0
        %v659 = vmax.f32 %v656, 0.0
        %v660 = vxor.u32 %v659, 2147483648
        %v661 = vmul.f32 %v660, 1.442695
        %v662 = vpow.pop %v661
        %v663 = vadd.f32 %v662, 1.0
        %v664 = vrcp.pop %v663
        %v665 = vmul.f32 1.0, %v664
        %666 = vset.pattern.permute.xlu0 0
        %667 = vperm.xlu0 %666, %v190
        %v668 = vpop.permute.xlu0 %667
        %v671 = vsel %vm206, %v187, 0
        %v673 = vsel %vm195, %v191, 0
        %v675 = vsel %vm195, %v193, 0
        %v677 = vand.u32 %v675, 4294901760
        %678 = vmatprep.subr.mxu0 %v677
        %v679 = vand.u32 %v673, 4294901760
        %680 = vmatpush1.msra.mxu0 %v679
        %681 = vmatprep.subr.mxu0 0.0
        %682 = vmatpush1.msra.mxu0 0.0
        %683 = vmatprep.subr.mxu0 0.0
        %684 = vmatpush1.msra.mxu0 0.0
        %685 = vmatprep.subr.mxu0 0.0
        %686 = vmatpush1.msra.mxu0 0.0
        %687 = vmatprep.subr.mxu0 0.0
        %688 = vmatpush1.msra.mxu0 0.0
        %689 = vmatprep.subr.mxu0 0.0
        %690 = vmatpush1.msra.mxu0 0.0
        %691 = vmatprep.subr.mxu0 0.0
        %692 = vmatpush1.msra.mxu0 0.0
        %693 = vmatprep.subr.mxu0 0.0
        %694 = vmatpush1.msra.mxu0 0.0
        %695 = vmatprep.subr.mxu0 0.0
        %696 = vmatpush1.msra.mxu0 0.0
        %697 = vmatprep.subr.mxu0 0.0
        %698 = vmatpush1.msra.mxu0 0.0
        %699 = vmatprep.subr.mxu0 0.0
        %700 = vmatpush1.msra.mxu0 0.0
        %701 = vmatprep.subr.mxu0 0.0
        %702 = vmatpush1.msra.mxu0 0.0
        %703 = vmatprep.subr.mxu0 0.0
        %704 = vmatpush1.msra.mxu0 0.0
        %705 = vmatprep.subr.mxu0 0.0
        %706 = vmatpush1.msra.mxu0 0.0
        %707 = vmatprep.subr.mxu0 0.0
        %708 = vmatpush1.msra.mxu0 0.0
        %709 = vmatprep.subr.mxu0 0.0
        %710 = vmatpush1.msra.mxu0 0.0
        %711 = vmatprep.subr.mxu0 0.0
        %712 = vmatpush1.msra.mxu0 0.0
        %713 = vmatprep.subr.mxu0 0.0
        %714 = vmatpush1.msra.mxu0 0.0
        %715 = vmatprep.subr.mxu0 0.0
        %716 = vmatpush1.msra.mxu0 0.0
        %717 = vmatprep.subr.mxu0 0.0
        %718 = vmatpush1.msra.mxu0 0.0
        %719 = vmatprep.subr.mxu0 0.0
        %720 = vmatpush1.msra.mxu0 0.0
        %721 = vmatprep.subr.mxu0 0.0
        %722 = vmatpush1.msra.mxu0 0.0
        %723 = vmatprep.subr.mxu0 0.0
        %724 = vmatpush1.msra.mxu0 0.0
        %725 = vmatprep.subr.mxu0 0.0
        %726 = vmatpush1.msra.mxu0 0.0
        %727 = vmatprep.subr.mxu0 0.0
        %728 = vmatpush1.msra.mxu0 0.0
        %729 = vmatprep.subr.mxu0 0.0
        %730 = vmatpush1.msra.mxu0 0.0
        %731 = vmatprep.subr.mxu0 0.0
        %732 = vmatpush1.msra.mxu0 0.0
        %733 = vmatprep.subr.mxu0 0.0
        %734 = vmatpush1.msra.mxu0 0.0
        %735 = vmatprep.subr.mxu0 0.0
        %736 = vmatpush1.msra.mxu0 0.0
        %737 = vmatprep.subr.mxu0 0.0
        %738 = vmatpush1.msra.mxu0 0.0
        %739 = vmatprep.subr.mxu0 0.0
        %740 = vmatpush1.msra.mxu0 0.0
        %741 = vmatprep.subr.mxu0 0.0
        %742 = vmatpush1.msra.mxu0 0.0
        %743 = vmatprep.mubr.f32.mxu0 0.0
        %v744 = vand.u32 %v671, 4294901760
        %v745 = vsub.f32 %v671, %v744
        %v746 = vand.u32 %v745, 4294901760
        %v747 = vsub.f32 %v745, %v746
        %v748 = vand.u32 %v747, 4294901760
        %749 = vmatmul.mubr.f32.gmra.mrb[0].mxu0 %v748
        %v750 = vpop.f32.mrb[0].mxu0
        %v751 = vadd.f32 %v668, %v750
        %v752 = vpop.f32.mrb[0].mxu0
        %v753 = vadd.f32 %v668, %v752
        %754 = vdwg.mxu0
        %v755 = vand.u32 %v675, 4294901760
        %v756 = vsub.f32 %v675, %v755
        %v757 = vand.u32 %v756, 4294901760
        %v758 = vsub.f32 %v756, %v757
        %v759 = vand.u32 %v758, 4294901760
        %760 = vmatprep.subr.mxu0 %v759
        %v761 = vand.u32 %v673, 4294901760
        %v762 = vsub.f32 %v673, %v761
        %v763 = vand.u32 %v762, 4294901760
        %v764 = vsub.f32 %v762, %v763
        %v765 = vand.u32 %v764, 4294901760
        %766 = vmatpush1.msra.mxu0 %v765
        %767 = vmatprep.subr.mxu0 0.0
        %768 = vmatpush1.msra.mxu0 0.0
        %769 = vmatprep.subr.mxu0 0.0
        %770 = vmatpush1.msra.mxu0 0.0
        %771 = vmatprep.subr.mxu0 0.0
        %772 = vmatpush1.msra.mxu0 0.0
        %773 = vmatprep.subr.mxu0 0.0
        %774 = vmatpush1.msra.mxu0 0.0
        %775 = vmatprep.subr.mxu0 0.0
        %776 = vmatpush1.msra.mxu0 0.0
        %777 = vmatprep.subr.mxu0 0.0
        %778 = vmatpush1.msra.mxu0 0.0
        %779 = vmatprep.subr.mxu0 0.0
        %780 = vmatpush1.msra.mxu0 0.0
        %781 = vmatprep.subr.mxu0 0.0
        %782 = vmatpush1.msra.mxu0 0.0
        %783 = vmatprep.subr.mxu0 0.0
        %784 = vmatpush1.msra.mxu0 0.0
        %785 = vmatprep.subr.mxu0 0.0
        %786 = vmatpush1.msra.mxu0 0.0
        %787 = vmatprep.subr.mxu0 0.0
        %788 = vmatpush1.msra.mxu0 0.0
        %789 = vmatprep.subr.mxu0 0.0
        %790 = vmatpush1.msra.mxu0 0.0
        %791 = vmatprep.subr.mxu0 0.0
        %792 = vmatpush1.msra.mxu0 0.0
        %793 = vmatprep.subr.mxu0 0.0
        %794 = vmatpush1.msra.mxu0 0.0
        %795 = vmatprep.subr.mxu0 0.0
        %796 = vmatpush1.msra.mxu0 0.0
        %797 = vmatprep.subr.mxu0 0.0
        %798 = vmatpush1.msra.mxu0 0.0
        %799 = vmatprep.subr.mxu0 0.0
        %800 = vmatpush1.msra.mxu0 0.0
        %801 = vmatprep.subr.mxu0 0.0
        %802 = vmatpush1.msra.mxu0 0.0
        %803 = vmatprep.subr.mxu0 0.0
        %804 = vmatpush1.msra.mxu0 0.0
        %805 = vmatprep.subr.mxu0 0.0
        %806 = vmatpush1.msra.mxu0 0.0
        %807 = vmatprep.subr.mxu0 0.0
        %808 = vmatpush1.msra.mxu0 0.0
        %809 = vmatprep.subr.mxu0 0.0
        %810 = vmatpush1.msra.mxu0 0.0
        %811 = vmatprep.subr.mxu0 0.0
        %812 = vmatpush1.msra.mxu0 0.0
        %813 = vmatprep.subr.mxu0 0.0
        %814 = vmatpush1.msra.mxu0 0.0
        %815 = vmatprep.subr.mxu0 0.0
        %816 = vmatpush1.msra.mxu0 0.0
        %817 = vmatprep.subr.mxu0 0.0
        %818 = vmatpush1.msra.mxu0 0.0
        %819 = vmatprep.subr.mxu0 0.0
        %820 = vmatpush1.msra.mxu0 0.0
        %821 = vmatprep.subr.mxu0 0.0
        %822 = vmatpush1.msra.mxu0 0.0
        %823 = vmatprep.subr.mxu0 0.0
        %824 = vmatpush1.msra.mxu0 0.0
        %825 = vmatprep.subr.mxu0 0.0
        %826 = vmatpush1.msra.mxu0 0.0
        %827 = vmatprep.subr.mxu0 0.0
        %828 = vmatpush1.msra.mxu0 0.0
        %829 = vmatprep.mubr.f32.mxu0 0.0
        %v830 = vand.u32 %v671, 4294901760
        %831 = vmatmul.mubr.f32.gmra.mrb[0].mxu0 %v830
        %v832 = vpop.f32.mrb[0].mxu0
        %v833 = vadd.f32 %v751, %v832
        %v834 = vpop.f32.mrb[0].mxu0
        %v835 = vadd.f32 %v753, %v834
        %836 = vdwg.mxu0
        %v837 = vand.u32 %v675, 4294901760
        %v838 = vsub.f32 %v675, %v837
        %839 = vmatprep.subr.mxu0 %v838
        %v840 = vand.u32 %v673, 4294901760
        %v841 = vsub.f32 %v673, %v840
        %842 = vmatpush1.msra.mxu0 %v841
        %843 = vmatprep.subr.mxu0 0.0
        %844 = vmatpush1.msra.mxu0 0.0
        %845 = vmatprep.subr.mxu0 0.0
        %846 = vmatpush1.msra.mxu0 0.0
        %847 = vmatprep.subr.mxu0 0.0
        %848 = vmatpush1.msra.mxu0 0.0
        %849 = vmatprep.subr.mxu0 0.0
        %850 = vmatpush1.msra.mxu0 0.0
        %851 = vmatprep.subr.mxu0 0.0
        %852 = vmatpush1.msra.mxu0 0.0
        %853 = vmatprep.subr.mxu0 0.0
        %854 = vmatpush1.msra.mxu0 0.0
        %855 = vmatprep.subr.mxu0 0.0
        %856 = vmatpush1.msra.mxu0 0.0
        %857 = vmatprep.subr.mxu0 0.0
        %858 = vmatpush1.msra.mxu0 0.0
        %859 = vmatprep.subr.mxu0 0.0
        %860 = vmatpush1.msra.mxu0 0.0
        %861 = vmatprep.subr.mxu0 0.0
        %862 = vmatpush1.msra.mxu0 0.0
        %863 = vmatprep.subr.mxu0 0.0
        %864 = vmatpush1.msra.mxu0 0.0
        %865 = vmatprep.subr.mxu0 0.0
        %866 = vmatpush1.msra.mxu0 0.0
        %867 = vmatprep.subr.mxu0 0.0
        %868 = vmatpush1.msra.mxu0 0.0
        %869 = vmatprep.subr.mxu0 0.0
        %870 = vmatpush1.msra.mxu0 0.0
        %871 = vmatprep.subr.mxu0 0.0
        %872 = vmatpush1.msra.mxu0 0.0
        %873 = vmatprep.subr.mxu0 0.0
        %874 = vmatpush1.msra.mxu0 0.0
        %875 = vmatprep.subr.mxu0 0.0
        %876 = vmatpush1.msra.mxu0 0.0
        %877 = vmatprep.subr.mxu0 0.0
        %878 = vmatpush1.msra.mxu0 0.0
        %879 = vmatprep.subr.mxu0 0.0
        %880 = vmatpush1.msra.mxu0 0.0
        %881 = vmatprep.subr.mxu0 0.0
        %882 = vmatpush1.msra.mxu0 0.0
        %883 = vmatprep.subr.mxu0 0.0
        %884 = vmatpush1.msra.mxu0 0.0
        %885 = vmatprep.subr.mxu0 0.0
        %886 = vmatpush1.msra.mxu0 0.0
        %887 = vmatprep.subr.mxu0 0.0
        %888 = vmatpush1.msra.mxu0 0.0
        %889 = vmatprep.subr.mxu0 0.0
        %890 = vmatpush1.msra.mxu0 0.0
        %891 = vmatprep.subr.mxu0 0.0
        %892 = vmatpush1.msra.mxu0 0.0
        %893 = vmatprep.subr.mxu0 0.0
        %894 = vmatpush1.msra.mxu0 0.0
        %895 = vmatprep.subr.mxu0 0.0
        %896 = vmatpush1.msra.mxu0 0.0
        %897 = vmatprep.subr.mxu0 0.0
        %898 = vmatpush1.msra.mxu0 0.0
        %899 = vmatprep.subr.mxu0 0.0
        %900 = vmatpush1.msra.mxu0 0.0
        %901 = vmatprep.subr.mxu0 0.0
        %902 = vmatpush1.msra.mxu0 0.0
        %903 = vmatprep.subr.mxu0 0.0
        %904 = vmatpush1.msra.mxu0 0.0
        %905 = vmatprep.mubr.f32.mxu0 0.0
        %v906 = vand.u32 %v671, 4294901760
        %v907 = vsub.f32 %v671, %v906
        %908 = vmatmul.mubr.f32.gmra.mrb[0].mxu0 %v907
        %v909 = vpop.f32.mrb[0].mxu0
        %v910 = vadd.f32 %v833, %v909
        %v911 = vpop.f32.mrb[0].mxu0
        %v912 = vadd.f32 %v835, %v911
        %913 = vdwg.mxu0
        %v914 = vand.u32 %v675, 4294901760
        %915 = vmatprep.subr.mxu0 %v914
        %v916 = vand.u32 %v673, 4294901760
        %917 = vmatpush1.msra.mxu0 %v916
        %918 = vmatprep.subr.mxu0 0.0
        %919 = vmatpush1.msra.mxu0 0.0
        %920 = vmatprep.subr.mxu0 0.0
        %921 = vmatpush1.msra.mxu0 0.0
        %922 = vmatprep.subr.mxu0 0.0
        %923 = vmatpush1.msra.mxu0 0.0
        %924 = vmatprep.subr.mxu0 0.0
        %925 = vmatpush1.msra.mxu0 0.0
        %926 = vmatprep.subr.mxu0 0.0
        %927 = vmatpush1.msra.mxu0 0.0
        %928 = vmatprep.subr.mxu0 0.0
        %929 = vmatpush1.msra.mxu0 0.0
        %930 = vmatprep.subr.mxu0 0.0
        %931 = vmatpush1.msra.mxu0 0.0
        %932 = vmatprep.subr.mxu0 0.0
        %933 = vmatpush1.msra.mxu0 0.0
        %934 = vmatprep.subr.mxu0 0.0
        %935 = vmatpush1.msra.mxu0 0.0
        %936 = vmatprep.subr.mxu0 0.0
        %937 = vmatpush1.msra.mxu0 0.0
        %938 = vmatprep.subr.mxu0 0.0
        %939 = vmatpush1.msra.mxu0 0.0
        %940 = vmatprep.subr.mxu0 0.0
        %941 = vmatpush1.msra.mxu0 0.0
        %942 = vmatprep.subr.mxu0 0.0
        %943 = vmatpush1.msra.mxu0 0.0
        %944 = vmatprep.subr.mxu0 0.0
        %945 = vmatpush1.msra.mxu0 0.0
        %946 = vmatprep.subr.mxu0 0.0
        %947 = vmatpush1.msra.mxu0 0.0
        %948 = vmatprep.subr.mxu0 0.0
        %949 = vmatpush1.msra.mxu0 0.0
        %950 = vmatprep.subr.mxu0 0.0
        %951 = vmatpush1.msra.mxu0 0.0
        %952 = vmatprep.subr.mxu0 0.0
        %953 = vmatpush1.msra.mxu0 0.0
        %954 = vmatprep.subr.mxu0 0.0
        %955 = vmatpush1.msra.mxu0 0.0
        %956 = vmatprep.subr.mxu0 0.0
        %957 = vmatpush1.msra.mxu0 0.0
        %958 = vmatprep.subr.mxu0 0.0
        %959 = vmatpush1.msra.mxu0 0.0
        %960 = vmatprep.subr.mxu0 0.0
        %961 = vmatpush1.msra.mxu0 0.0
        %962 = vmatprep.subr.mxu0 0.0
        %963 = vmatpush1.msra.mxu0 0.0
        %964 = vmatprep.subr.mxu0 0.0
        %965 = vmatpush1.msra.mxu0 0.0
        %966 = vmatprep.subr.mxu0 0.0
        %967 = vmatpush1.msra.mxu0 0.0
        %968 = vmatprep.subr.mxu0 0.0
        %969 = vmatpush1.msra.mxu0 0.0
        %970 = vmatprep.subr.mxu0 0.0
        %971 = vmatpush1.msra.mxu0 0.0
        %972 = vmatprep.subr.mxu0 0.0
        %973 = vmatpush1.msra.mxu0 0.0
        %974 = vmatprep.subr.mxu0 0.0
        %975 = vmatpush1.msra.mxu0 0.0
        %976 = vmatprep.subr.mxu0 0.0
        %977 = vmatpush1.msra.mxu0 0.0
        %978 = vmatprep.subr.mxu0 0.0
        %979 = vmatpush1.msra.mxu0 0.0
        %980 = vmatprep.mubr.f32.mxu0 0.0
        %v981 = vand.u32 %v671, 4294901760
        %v982 = vsub.f32 %v671, %v981
        %v983 = vand.u32 %v982, 4294901760
        %984 = vmatmul.mubr.f32.gmra.mrb[0].mxu0 %v983
        %v985 = vpop.f32.mrb[0].mxu0
        %v986 = vadd.f32 %v910, %v985
        %v987 = vpop.f32.mrb[0].mxu0
        %v988 = vadd.f32 %v912, %v987
        %989 = vdwg.mxu0
        %v990 = vand.u32 %v675, 4294901760
        %v991 = vsub.f32 %v675, %v990
        %v992 = vand.u32 %v991, 4294901760
        %993 = vmatprep.subr.mxu0 %v992
        %v994 = vand.u32 %v673, 4294901760
        %v995 = vsub.f32 %v673, %v994
        %v996 = vand.u32 %v995, 4294901760
        %997 = vmatpush1.msra.mxu0 %v996
        %998 = vmatprep.subr.mxu0 0.0
        %999 = vmatpush1.msra.mxu0 0.0
        %1000 = vmatprep.subr.mxu0 0.0
        %1001 = vmatpush1.msra.mxu0 0.0
        %1002 = vmatprep.subr.mxu0 0.0
        %1003 = vmatpush1.msra.mxu0 0.0
        %1004 = vmatprep.subr.mxu0 0.0
        %1005 = vmatpush1.msra.mxu0 0.0
        %1006 = vmatprep.subr.mxu0 0.0
        %1007 = vmatpush1.msra.mxu0 0.0
        %1008 = vmatprep.subr.mxu0 0.0
        %1009 = vmatpush1.msra.mxu0 0.0
        %1010 = vmatprep.subr.mxu0 0.0
        %1011 = vmatpush1.msra.mxu0 0.0
        %1012 = vmatprep.subr.mxu0 0.0
        %1013 = vmatpush1.msra.mxu0 0.0
        %1014 = vmatprep.subr.mxu0 0.0
        %1015 = vmatpush1.msra.mxu0 0.0
        %1016 = vmatprep.subr.mxu0 0.0
        %1017 = vmatpush1.msra.mxu0 0.0
        %1018 = vmatprep.subr.mxu0 0.0
        %1019 = vmatpush1.msra.mxu0 0.0
        %1020 = vmatprep.subr.mxu0 0.0
        %1021 = vmatpush1.msra.mxu0 0.0
        %1022 = vmatprep.subr.mxu0 0.0
        %1023 = vmatpush1.msra.mxu0 0.0
        %1024 = vmatprep.subr.mxu0 0.0
        %1025 = vmatpush1.msra.mxu0 0.0
        %1026 = vmatprep.subr.mxu0 0.0
        %1027 = vmatpush1.msra.mxu0 0.0
        %1028 = vmatprep.subr.mxu0 0.0
        %1029 = vmatpush1.msra.mxu0 0.0
        %1030 = vmatprep.subr.mxu0 0.0
        %1031 = vmatpush1.msra.mxu0 0.0
        %1032 = vmatprep.subr.mxu0 0.0
        %1033 = vmatpush1.msra.mxu0 0.0
        %1034 = vmatprep.subr.mxu0 0.0
        %1035 = vmatpush1.msra.mxu0 0.0
        %1036 = vmatprep.subr.mxu0 0.0
        %1037 = vmatpush1.msra.mxu0 0.0
        %1038 = vmatprep.subr.mxu0 0.0
        %1039 = vmatpush1.msra.mxu0 0.0
        %1040 = vmatprep.subr.mxu0 0.0
        %1041 = vmatpush1.msra.mxu0 0.0
        %1042 = vmatprep.subr.mxu0 0.0
        %1043 = vmatpush1.msra.mxu0 0.0
        %1044 = vmatprep.subr.mxu0 0.0
        %1045 = vmatpush1.msra.mxu0 0.0
        %1046 = vmatprep.subr.mxu0 0.0
        %1047 = vmatpush1.msra.mxu0 0.0
        %1048 = vmatprep.subr.mxu0 0.0
        %1049 = vmatpush1.msra.mxu0 0.0
        %1050 = vmatprep.subr.mxu0 0.0
        %1051 = vmatpush1.msra.mxu0 0.0
        %1052 = vmatprep.subr.mxu0 0.0
        %1053 = vmatpush1.msra.mxu0 0.0
        %1054 = vmatprep.subr.mxu0 0.0
        %1055 = vmatpush1.msra.mxu0 0.0
        %1056 = vmatprep.subr.mxu0 0.0
        %1057 = vmatpush1.msra.mxu0 0.0
        %1058 = vmatprep.subr.mxu0 0.0
        %1059 = vmatpush1.msra.mxu0 0.0
        %1060 = vmatprep.mubr.f32.mxu0 0.0
        %v1061 = vand.u32 %v671, 4294901760
        %1062 = vmatmul.mubr.f32.gmra.mrb[0].mxu0 %v1061
        %v1063 = vpop.f32.mrb[0].mxu0
        %v1064 = vadd.f32 %v986, %v1063
        %v1065 = vpop.f32.mrb[0].mxu0
        %v1066 = vadd.f32 %v988, %v1065
        %1067 = vdwg.mxu0
        %v1068 = vand.u32 %v675, 4294901760
        %1069 = vmatprep.subr.mxu0 %v1068
        %v1070 = vand.u32 %v673, 4294901760
        %1071 = vmatpush1.msra.mxu0 %v1070
        %1072 = vmatprep.subr.mxu0 0.0
        %1073 = vmatpush1.msra.mxu0 0.0
        %1074 = vmatprep.subr.mxu0 0.0
        %1075 = vmatpush1.msra.mxu0 0.0
        %1076 = vmatprep.subr.mxu0 0.0
        %1077 = vmatpush1.msra.mxu0 0.0
        %1078 = vmatprep.subr.mxu0 0.0
        %1079 = vmatpush1.msra.mxu0 0.0
        %1080 = vmatprep.subr.mxu0 0.0
        %1081 = vmatpush1.msra.mxu0 0.0
        %1082 = vmatprep.subr.mxu0 0.0
        %1083 = vmatpush1.msra.mxu0 0.0
        %1084 = vmatprep.subr.mxu0 0.0
        %1085 = vmatpush1.msra.mxu0 0.0
        %1086 = vmatprep.subr.mxu0 0.0
        %1087 = vmatpush1.msra.mxu0 0.0
        %1088 = vmatprep.subr.mxu0 0.0
        %1089 = vmatpush1.msra.mxu0 0.0
        %1090 = vmatprep.subr.mxu0 0.0
        %1091 = vmatpush1.msra.mxu0 0.0
        %1092 = vmatprep.subr.mxu0 0.0
        %1093 = vmatpush1.msra.mxu0 0.0
        %1094 = vmatprep.subr.mxu0 0.0
        %1095 = vmatpush1.msra.mxu0 0.0
        %1096 = vmatprep.subr.mxu0 0.0
        %1097 = vmatpush1.msra.mxu0 0.0
        %1098 = vmatprep.subr.mxu0 0.0
        %1099 = vmatpush1.msra.mxu0 0.0
        %1100 = vmatprep.subr.mxu0 0.0
        %1101 = vmatpush1.msra.mxu0 0.0
        %1102 = vmatprep.subr.mxu0 0.0
        %1103 = vmatpush1.msra.mxu0 0.0
        %1104 = vmatprep.subr.mxu0 0.0
        %1105 = vmatpush1.msra.mxu0 0.0
        %1106 = vmatprep.subr.mxu0 0.0
        %1107 = vmatpush1.msra.mxu0 0.0
        %1108 = vmatprep.subr.mxu0 0.0
        %1109 = vmatpush1.msra.mxu0 0.0
        %1110 = vmatprep.subr.mxu0 0.0
        %1111 = vmatpush1.msra.mxu0 0.0
        %1112 = vmatprep.subr.mxu0 0.0
        %1113 = vmatpush1.msra.mxu0 0.0
        %1114 = vmatprep.subr.mxu0 0.0
        %1115 = vmatpush1.msra.mxu0 0.0
        %1116 = vmatprep.subr.mxu0 0.0
        %1117 = vmatpush1.msra.mxu0 0.0
        %1118 = vmatprep.subr.mxu0 0.0
        %1119 = vmatpush1.msra.mxu0 0.0
        %1120 = vmatprep.subr.mxu0 0.0
        %1121 = vmatpush1.msra.mxu0 0.0
        %1122 = vmatprep.subr.mxu0 0.0
        %1123 = vmatpush1.msra.mxu0 0.0
        %1124 = vmatprep.subr.mxu0 0.0
        %1125 = vmatpush1.msra.mxu0 0.0
        %1126 = vmatprep.subr.mxu0 0.0
        %1127 = vmatpush1.msra.mxu0 0.0
        %1128 = vmatprep.subr.mxu0 0.0
        %1129 = vmatpush1.msra.mxu0 0.0
        %1130 = vmatprep.subr.mxu0 0.0
        %1131 = vmatpush1.msra.mxu0 0.0
        %1132 = vmatprep.subr.mxu0 0.0
        %1133 = vmatpush1.msra.mxu0 0.0
        %1134 = vmatprep.mubr.f32.mxu0 0.0
        %v1135 = vand.u32 %v671, 4294901760
        %1136 = vmatmul.mubr.f32.gmra.mrb[0].mxu0 %v1135
        %v1137 = vpop.f32.mrb[0].mxu0
        %v1138 = vadd.f32 %v1064, %v1137
        %v1139 = vpop.f32.mrb[0].mxu0
        %v1140 = vadd.f32 %v1066, %v1139
        %1141 = vdwg.mxu0
        %v1142 = vxor.u32 %v1138, 2147483648
        %v1143 = vxor.u32 %v1140, 2147483648
        %v1144 = vmul.f32 %v1142, 1.442695
        %v1145 = vpow.pop %v1144
        %v1146 = vmul.f32 %v1143, 1.442695
        %v1147 = vpow.pop %v1146
        %v1148 = vadd.f32 %v1145, 1.0
        %v1149 = vadd.f32 %v1147, 1.0
        %v1150 = vrcp.pop %v1148
        %v1151 = vmul.f32 1.0, %v1150
        %v1152 = vrcp.pop %v1149
        %v1153 = vmul.f32 1.0, %v1152
        %1155 = vset.pattern.permute.xlu0 0
        %1156 = vperm.xlu0 %1155, %v665
        %v1157 = vpop.permute.xlu0 %1156
        %v1159 = vadd.f32 %v1157, %v1151
        %v1160 = vadd.f32 %v1157, %v1153
        %v1163 = vcombine.low %v1159, %v1160
        %v1165 = vmul.f32 %v191, %v1163
        %1166 = vst [vmem:[%s186] sm:$0xff] %v1165
        %s1167 = sand.u32 %s96, 1
        %s1168 = scalar_lea.sflag [#allocation4], %s1167
        %s1169 = sand.u32 %s96, 1
        %s1170 = smul.addr %s1169, 8
        %s1171 = scalar_lea.vmem [#allocation5], %s1170
        // Predicated region
        $region37: #{tpu_custom_call.1} parent=31 // pred_check
          %p1172 = pneg %p106
        $region38: #{tpu_custom_call.1} parent=31 // pred_check_branch
          %1174 = sbr.rel (%p1172) target = $region40
        $region39: #{tpu_custom_call.1} parent=31 // pred_region
          %s1176 = ssub.s32 128, 128
          %1177 = vsyncadd %s1168, %s1176
          %s1178 = smul.addr %s20, 2
          %s1179 = smul.addr %s1178, 64
          %s1180 = scalar_lea.hbm %s3, %s1179
          %s1182 = sshll.u32 %s1171, 4
          %s1183 = int_to_ptr.vmem [resolvable:$true] %s1182
          %1185 = dma.vmem_to_hbm [thread:$0]  %s1183, 128, %s1180, %s1168
        $region40: #{tpu_custom_call.1} parent=31 // pred_fallthru
          _
      $region32: #{tpu_custom_call.1} parent=5 // pred_fallthru
        _
      %p1186 = scmp.le.s32.totalorder 2, %s15
      // Predicated region
      $region41: #{tpu_custom_call.1} parent=5 // pred_check
        %p1187 = pneg %p1186
      $region42: #{tpu_custom_call.1} parent=5 // pred_check_branch
        %1189 = sbr.rel (%p1187) target = $region44
      $region43: #{tpu_custom_call.1} parent=5 // pred_region
        %s1190 = ssub.s32 %s15, 2
        // Predicated region
        $region45: #{tpu_custom_call.1} parent=43 // pred_check
          %p1191 = pneg %p112
        $region46: #{tpu_custom_call.1} parent=43 // pred_check_branch
          %1193 = sbr.rel (%p1191) target = $region48
        $region47: #{tpu_custom_call.1} parent=43 // pred_region
          %s1194 = sand.u32 %s97, 1
          %s1195 = scalar_lea.sflag [#allocation4], %s1194
          %s1196 = sand.u32 %s97, 1
          %s1197 = smul.addr %s1196, 8
          %s1198 = scalar_lea.vmem [#allocation5], %s1197
          %1199 = dma.done %s1195, 128
        $region48: #{tpu_custom_call.1} parent=43 // pred_fallthru
          _
      $region44: #{tpu_custom_call.1} parent=5 // pred_fallthru
        _
    $region6: #{tpu_custom_call.1} parent=1 // loop_footer
      %s19 = sadd.s32 1, %s15
    $region7: #{tpu_custom_call.1} parent=1 // loop_footer_branch
      %14 = sbr.rel target = $region3
    $region8: #{tpu_custom_call.1} parent=1 // loop_exit
      _
    %1200 = vsyncpa [#allocation3], 1
    %s1201 = scalar_lea.sflag [#allocation3], 1
    %1202 = vsyncpa %s1201, 1
    %1203 = vsyncpa [#allocation4], 1
    %s1204 = scalar_lea.sflag [#allocation4], 1
    %1205 = vsyncpa %s1204, 1

</llo_original>
